<compile_context>
chip_gen: v6e
topology: v6e:2x2x1
jax: 0.10.0
libtpu: 0.0.40
codegen_flags: <defaults>
</compile_context>

<pallas_src>
import functools

import jax
import jax.numpy as jnp
from jax.experimental import pallas as pl
from jax.experimental.pallas import tpu as pltpu


def _round_up(x, m):
    return (x + m - 1) // m * m


def _pad2(a, rows, cols):
    return jnp.pad(a, ((0, rows - a.shape[0]), (0, cols - a.shape[1])))


# ----------------------------------------------------------------------------- kernel

def _fused_sage_kernel(n_layers, fuse_wcat, *refs):
    """Fused n-layer SAGEConv('mean') forward.

    refs = (h0_ref, <per-layer refs>, o_ref)

    per-layer refs (fuse_wcat=True):   a_ref, dinv_ref, wcat_ref, b_ref
    per-layer refs (fuse_wcat=False):  a_ref, dinv_ref, wself_ref, wneigh_ref, b_ref

      h0_ref:   [S0_pad, F_pad]        bf16 padded source features
      a_ref:    [D_pad, S_pad]         bf16 0/1 adjacency mask (zero-padded)
      dinv_ref: [D_pad, 1]             f32 1/deg row scale (0 on padded rows)
      wcat_ref: [2*F_pad, Fout_pad]    bf16 stacked [W_self; W_neigh]
      b_ref:    [1, Fout_pad]          f32 bias
      o_ref:    [D_last_pad, Fout_pad] f32
    """
    h_ref = refs[0]
    o_ref = refs[-1]
    layer_refs = refs[1:-1]
    per = 4 if fuse_wcat else 5

    h = h_ref[...]  # bf16, stays on-chip between layers
    for l in range(n_layers):
        lr = layer_refs[per * l: per * (l + 1)]
        if fuse_wcat:
            a_ref, dinv_ref, wc_ref, b_ref = lr
        else:
            a_ref, dinv_ref, ws_ref, wn_ref, b_ref = lr
        ndp = a_ref.shape[0]  # padded dst count for this layer (static)

        # neighbor sum on the MXU (bf16 feed, f32 accumulate), then exact f32 1/deg
        agg = jnp.dot(a_ref[...], h, preferred_element_type=jnp.float32)
        h_neigh = agg * dinv_ref[...]  # VPU row-scale, free under MXU/DMA bound

        # dst nodes are the first rows of the src set (DGL block convention)
        h_dst = h[:ndp, :]
        if fuse_wcat:
            # v6e/v7x: one K=2*F MXU pass over [h_dst | h_neigh] @ [[W_self];[W_neigh]]
            h_cat = jnp.concatenate([h_dst, h_neigh.astype(jnp.bfloat16)], axis=-1)
            out = jnp.dot(h_cat, wc_ref[...],
                          preferred_element_type=jnp.float32) + b_ref[...]
        else:
            # v5e/older (128-deep MXU): two dots summed in f32, no lane concat
            out = (jnp.dot(h_dst, ws_ref[...], preferred_element_type=jnp.float32)
                   + jnp.dot(h_neigh.astype(jnp.bfloat16), wn_ref[...],
                             preferred_element_type=jnp.float32)
                   + b_ref[...])

        if l != n_layers - 1:
            # ReLU; nn.Dropout(p=0.0) / eval mode -> identity
            h = jnp.maximum(out, 0.0).astype(jnp.bfloat16)
        else:
            o_ref[...] = out.astype(o_ref.dtype)


# ----------------------------------------------------------------------------- wrapper

def build_sage_forward(params, in_feats, fuse_wcat=None):
    """One-time parameter prep + jitted fused forward.

    params: list of (w_self [in,out], w_neigh [in,out], bias [1,out]) f32 per layer.
    Returns forward(x, block_masks, deg_invs) -> [D_last_pad, n_classes] f32
      (caller slices rows to the true dst count of the last block).
    """
    n_layers = len(params)
    n_classes = int(params[-1][0].shape[1])
    feat_dims = [int(in_feats)] + [int(p[0].shape[1]) for p in params[:-1]]
    f_pad = _round_up(max(feat_dims), 128)   # lane-dense hidden width
    out_pad = _round_up(n_classes, 128)      # lane-dense final output width

    if fuse_wcat is None:
        # v6e/v7x MXU is 256 deep in K -> fused K=2*F matmul saves a pass.
        # v5e/v4/older are 128 deep -> the concat is pure VPU/VMEM overhead.
        try:
            kind = jax.devices()[0].device_kind.lower()
        except Exception:
            kind = ""
        fuse_wcat = not any(v in kind for v in ("v2", "v3", "v4", "v5"))

    # ---- one-time weight prep (hoisted out of the per-call path) ----
    layer_weights = []
    for l, (w_self, w_neigh, bias) in enumerate(params):
        fout = f_pad if l != n_layers - 1 else out_pad
        ws = _pad2(w_self, f_pad, fout).astype(jnp.bfloat16)
        wn = _pad2(w_neigh, f_pad, fout).astype(jnp.bfloat16)
        b = _pad2(bias, 1, fout).astype(jnp.float32)
        if fuse_wcat:
            layer_weights.append((jnp.concatenate([ws, wn], axis=0), b))
        else:
            layer_weights.append((ws, wn, b))

    kernel = functools.partial(_fused_sage_kernel, n_layers, fuse_wcat)

    @jax.jit
    def forward(x, block_masks, deg_invs):
        # block_masks[l]: [D_l_pad, S_l_pad] bf16 0/1; deg_invs[l]: [D_l_pad, 1] f32
        s0_pad = block_masks[0].shape[1]
        d_last_pad = block_masks[-1].shape[0]
        # TODO(synk): for the tiled/scaled version, keep x at natural width in HBM and
        # pad to 128 lanes only when staging into VMEM.
        h0 = _pad2(x, s0_pad, f_pad).astype(jnp.bfloat16)

        kernel_inputs = [h0]
        for l in range(n_layers):
            kernel_inputs += [block_masks[l], deg_invs[l], *layer_weights[l]]

        out = pl.pallas_call(
            kernel,
            out_shape=jax.ShapeDtypeStruct((d_last_pad, out_pad), jnp.float32),
            in_specs=[pl.BlockSpec(memory_space=pltpu.MemorySpace.VMEM)
                      for _ in kernel_inputs],
            out_specs=pl.BlockSpec(memory_space=pltpu.MemorySpace.VMEM),
            compiler_params=pltpu.CompilerParams(vmem_limit_bytes=32 * 1024 * 1024),
        )(*kernel_inputs)
        return out[:, :n_classes]

    return forward


def prep_block(adj_mask, num_dst_pad, num_src_pad):
    """Turn a 0/1 adjacency mask into padded kernel inputs.

    Returns (mask_bf16 [num_dst_pad, num_src_pad], deg_inv_f32 [num_dst_pad, 1]).
    In production this is done once per sampled batch on the sampler->device path.
    """
    deg = jnp.sum(adj_mask, axis=1, keepdims=True)
    deg_inv = jnp.where(deg > 0, 1.0 / deg, 0.0).astype(jnp.float32)
    mask_p = _pad2(adj_mask, num_dst_pad, num_src_pad).astype(jnp.bfloat16)
    dinv_p = _pad2(deg_inv, num_dst_pad, 1)
    return mask_p, dinv_p


# ----------------------------------------------------------------------------- harness

def _make_mask(key, num_dst, num_src):
    """Random 0/1 bipartite adjacency mask with guaranteed self edges (dst i == src i)."""
    mask = jax.random.bernoulli(key, p=0.3, shape=(num_dst, num_src)).astype(jnp.float32)
    self_loop = jnp.zeros((num_dst, num_src), jnp.float32).at[
        jnp.arange(num_dst), jnp.arange(num_dst)].set(1.0)
    return jnp.maximum(mask, self_loop)


def _init_layer_params(key, in_feat, out_feat):
    k1, k2, k3 = jax.random.split(key, 3)
    scale = 1.0 / jnp.sqrt(jnp.float32(in_feat))
    w_self = jax.random.normal(k1, (in_feat, out_feat), jnp.float32) * scale
    w_neigh = jax.random.normal(k2, (in_feat, out_feat), jnp.float32) * scale
    bias = jax.random.normal(k3, (1, out_feat), jnp.float32) * 0.01
    return w_self, w_neigh, bias


def _reference_forward(masks, x, params):
    """Pure-JAX f32 reference of DGL SAGEConv('mean') stack."""
    h = x
    n_layers = len(params)
    for l, (mask, (ws, wn, b)) in enumerate(zip(masks, params)):
        nd = mask.shape[0]
        deg = jnp.sum(mask, axis=1, keepdims=True)
        h_neigh = (mask @ h) / deg
        h = h[:nd] @ ws + h_neigh @ wn + b
        if l != n_layers - 1:
            h = jnp.maximum(h, 0.0)
    return h


if __name__ == "__main__":
    # args: fan_out=[10, 10] (2 layers), input_dim=32, num_hidden=32,
    #       num_classes=8, dropout=0.0
    in_feats, n_hidden, n_classes = 32, 32, 8
    num_src0, num_dst0 = 64, 32    # block 0: 64 src -> 32 dst
    num_src1, num_dst1 = 32, 16    # block 1: 32 src -> 16 dst  (dst0 == src1)

    key = jax.random.PRNGKey(0)
    k_x, k_b0, k_b1, k_l0, k_l1 = jax.random.split(key, 5)

    x = jax.random.normal(k_x, (num_src0, in_feats), jnp.float32)
    mask0 = _make_mask(k_b0, num_dst0, num_src0)
    mask1 = _make_mask(k_b1, num_dst1, num_src1)
    params = [
        _init_layer_params(k_l0, in_feats, n_hidden),
        _init_layer_params(k_l1, n_hidden, n_classes),
    ]

    # padded node counts: src / contraction dims -> 128 (lane-dense A, MXU K),
    # final dst dim -> bf16 sublane multiple (16).
    p0 = _round_up(num_src0, 128)      # 128
    p1 = _round_up(num_dst0, 128)      # 128 (dst of block 0 == src of block 1)
    p2 = _round_up(num_dst1, 16)       # 16

    a0_bf16, dinv0 = prep_block(mask0, p1, p0)
    a1_bf16, dinv1 = prep_block(mask1, p2, p1)

    # one-time weight prep + jitted fused forward (per-call path does no weight work)
    # TODO(synk): batch multiple sampled blocks along the dst-row dim per launch when
    # serving, to fill MXU rows and amortize launch/DMA overhead.
    forward = build_sage_forward(params, in_feats)

    out_padded = forward(x, (a0_bf16, a1_bf16), (dinv0, dinv1))
    out_padded = jax.block_until_ready(out_padded)
    out = out_padded[:num_dst1]
    assert out.shape == (num_dst1, n_classes), out.shape
    assert bool(jnp.isfinite(out).all())

    # f32 reference check (mixed-precision: bf16 MXU feed, f32 accumulate + 1/deg)
    ref = _reference_forward([mask0, mask1], x, params)
    err = float(jnp.max(jnp.abs(out - ref)))
    tol = 0.05 * float(jnp.max(jnp.abs(ref))) + 0.02
    assert err < tol, (err, tol)

    print("KERNEL_OK")
</pallas_src>

<mosaic_0001>
module attributes {stable_mosaic.version = 11 : i64} {
  func.func @_fused_sage_kernel(%arg0: memref<128x128xbf16, #tpu.memory_space<vmem>>, %arg1: memref<128x128xbf16, #tpu.memory_space<vmem>>, %arg2: memref<128x1xf32, #tpu.memory_space<vmem>>, %arg3: memref<256x128xbf16, #tpu.memory_space<vmem>>, %arg4: memref<1x128xf32, #tpu.memory_space<vmem>>, %arg5: memref<16x128xbf16, #tpu.memory_space<vmem>>, %arg6: memref<16x1xf32, #tpu.memory_space<vmem>>, %arg7: memref<256x128xbf16, #tpu.memory_space<vmem>>, %arg8: memref<1x128xf32, #tpu.memory_space<vmem>>, %arg9: memref<16x128xf32, #tpu.memory_space<vmem>>) attributes {dimension_semantics = [], scalar_prefetch = 0 : i64, scratch_operands = 0 : i64, tpu.core_type = #tpu.core_type<tc>} {
    %c0 = arith.constant 0 : index
    %c0_0 = arith.constant 0 : index
    %0 = vector.load %arg0[%c0, %c0_0] : memref<128x128xbf16, #tpu.memory_space<vmem>>, vector<128x128xbf16>
    %c0_1 = arith.constant 0 : index
    %c0_2 = arith.constant 0 : index
    %1 = vector.load %arg1[%c0_1, %c0_2] : memref<128x128xbf16, #tpu.memory_space<vmem>>, vector<128x128xbf16>
    %cst = arith.constant dense<0.000000e+00> : vector<128x128xf32>
    %2 = tpu.matmul %1, %0, %cst {dimension_numbers = #tpu.dot_dimension_numbers<[1], [0], [0], [1], [0, 0, 1, 1], [], []>} : vector<128x128xbf16>, vector<128x128xbf16>, vector<128x128xf32> -> vector<128x128xf32>
    %c0_3 = arith.constant 0 : index
    %c0_4 = arith.constant 0 : index
    %3 = vector.load %arg2[%c0_3, %c0_4] : memref<128x1xf32, #tpu.memory_space<vmem>>, vector<128x1xf32>
    %4 = vector.broadcast %3 : vector<128x1xf32> to vector<128x128xf32>
    %5 = arith.mulf %2, %4 : vector<128x128xf32>
    %6 = arith.truncf %5 : vector<128x128xf32> to vector<128x128xbf16>
    %7 = tpu.concatenate %0, %6 in 1 : vector<128x128xbf16>, vector<128x128xbf16> -> vector<128x256xbf16>
    %c0_5 = arith.constant 0 : index
    %c0_6 = arith.constant 0 : index
    %8 = vector.load %arg3[%c0_5, %c0_6] : memref<256x128xbf16, #tpu.memory_space<vmem>>, vector<256x128xbf16>
    %cst_7 = arith.constant dense<0.000000e+00> : vector<128x128xf32>
    %9 = tpu.matmul %7, %8, %cst_7 {dimension_numbers = #tpu.dot_dimension_numbers<[1], [0], [0], [1], [0, 0, 1, 1], [], []>} : vector<128x256xbf16>, vector<256x128xbf16>, vector<128x128xf32> -> vector<128x128xf32>
    %c0_8 = arith.constant 0 : index
    %c0_9 = arith.constant 0 : index
    %10 = vector.load %arg4[%c0_8, %c0_9] : memref<1x128xf32, #tpu.memory_space<vmem>>, vector<1x128xf32>
    %11 = vector.broadcast %10 : vector<1x128xf32> to vector<128x128xf32>
    %12 = arith.addf %9, %11 : vector<128x128xf32>
    %cst_10 = arith.constant 0.000000e+00 : f32
    %13 = vector.broadcast %cst_10 : f32 to vector<128x128xf32>
    %14 = arith.maximumf %12, %13 : vector<128x128xf32>
    %15 = arith.truncf %14 : vector<128x128xf32> to vector<128x128xbf16>
    %c0_11 = arith.constant 0 : index
    %c0_12 = arith.constant 0 : index
    %16 = vector.load %arg5[%c0_11, %c0_12] : memref<16x128xbf16, #tpu.memory_space<vmem>>, vector<16x128xbf16>
    %cst_13 = arith.constant dense<0.000000e+00> : vector<16x128xf32>
    %17 = tpu.matmul %16, %15, %cst_13 {dimension_numbers = #tpu.dot_dimension_numbers<[1], [0], [0], [1], [0, 0, 1, 1], [], []>} : vector<16x128xbf16>, vector<128x128xbf16>, vector<16x128xf32> -> vector<16x128xf32>
    %c0_14 = arith.constant 0 : index
    %c0_15 = arith.constant 0 : index
    %18 = vector.load %arg6[%c0_14, %c0_15] : memref<16x1xf32, #tpu.memory_space<vmem>>, vector<16x1xf32>
    %19 = vector.broadcast %18 : vector<16x1xf32> to vector<16x128xf32>
    %20 = arith.mulf %17, %19 : vector<16x128xf32>
    %21 = vector.extract_strided_slice %15 {offsets = [0, 0], sizes = [16, 128], strides = [1, 1]} : vector<128x128xbf16> to vector<16x128xbf16>
    %22 = arith.truncf %20 : vector<16x128xf32> to vector<16x128xbf16>
    %23 = tpu.concatenate %21, %22 in 1 : vector<16x128xbf16>, vector<16x128xbf16> -> vector<16x256xbf16>
    %c0_16 = arith.constant 0 : index
    %c0_17 = arith.constant 0 : index
    %24 = vector.load %arg7[%c0_16, %c0_17] : memref<256x128xbf16, #tpu.memory_space<vmem>>, vector<256x128xbf16>
    %cst_18 = arith.constant dense<0.000000e+00> : vector<16x128xf32>
    %25 = tpu.matmul %23, %24, %cst_18 {dimension_numbers = #tpu.dot_dimension_numbers<[1], [0], [0], [1], [0, 0, 1, 1], [], []>} : vector<16x256xbf16>, vector<256x128xbf16>, vector<16x128xf32> -> vector<16x128xf32>
    %c0_19 = arith.constant 0 : index
    %c0_20 = arith.constant 0 : index
    %26 = vector.load %arg8[%c0_19, %c0_20] : memref<1x128xf32, #tpu.memory_space<vmem>>, vector<1x128xf32>
    %27 = vector.broadcast %26 : vector<1x128xf32> to vector<16x128xf32>
    %28 = arith.addf %25, %27 : vector<16x128xf32>
    %c0_21 = arith.constant 0 : index
    %c0_22 = arith.constant 0 : index
    %29 = vector.load %arg9[%c0_21, %c0_22] : memref<16x128xf32, #tpu.memory_space<vmem>>, vector<16x128xf32>
    tpu.vector_store %arg9[%c0_21, %c0_22], %28 {strides = array<i32>} : memref<16x128xf32, #tpu.memory_space<vmem>>, vector<16x128xf32>,
    return
  }
}

</mosaic_0001>

<llo_original>
// kernel: forward.1
$region0: #{forward.1}
  #allocation0 [shape = 'u32[]', space=smem, size = 0x4, offset = 0x4, fixed_abs, tag = 'smem constant byte address 0x4 - core index']
  #allocation1 [shape = 'u32[144,128]{1,0:T(1,128)}', space=vmem, size = 0x12000, scoped, tag = 'internal scratch']
  %s0 = inlined_call_operand.vmem [shape: bf16[128,128], index: 0, kind: input, shape index: {}]
  %s1 = inlined_call_operand.vmem [shape: bf16[128,128], index: 1, kind: input, shape index: {}]
  %s2 = inlined_call_operand.vmem [shape: f32[128,1], index: 2, kind: input, shape index: {}]
  %s3 = inlined_call_operand.vmem [shape: bf16[256,128], index: 3, kind: input, shape index: {}]
  %s4 = inlined_call_operand.vmem [shape: f32[1,128], index: 4, kind: input, shape index: {}]
  %s5 = inlined_call_operand.vmem [shape: bf16[16,128], index: 5, kind: input, shape index: {}]
  %s6 = inlined_call_operand.vmem [shape: f32[16,1], index: 6, kind: input, shape index: {}]
  %s7 = inlined_call_operand.vmem [shape: bf16[256,128], index: 7, kind: input, shape index: {}]
  %s8 = inlined_call_operand.vmem [shape: f32[1,128], index: 8, kind: input, shape index: {}]
  %s9 = inlined_call_operand.vmem [shape: f32[16,128], index: 9, kind: output, shape index: {}]
  %s10 = sld [smem:[#allocation0]]
  $region46: #{forward.1} parent=0
    _
  %s12 = ssub.s32 1, %s10
  %s13 = scalar_select 0, %s12, %s10
  // Predicated region
  $region2: #{forward.1} parent=0 // pred_check
    _
  $region3: #{forward.1} parent=0 // pred_check_branch
    %15 = sbr.rel (0) target = $region5
  $region4: #{forward.1} parent=0 // pred_region
    _
  $region5: #{forward.1} parent=0 // pred_fallthru
    _
  // Predicated region
  $region6: #{forward.1} parent=0 // pred_check
    _
  $region7: #{forward.1} parent=0 // pred_check_branch
    %17 = sbr.rel (0) target = $region9
  $region8: #{forward.1} parent=0 // pred_region
    _
  $region9: #{forward.1} parent=0 // pred_fallthru
    _
  // Predicated region
  $region10: #{forward.1} parent=0 // pred_check
    _
  $region11: #{forward.1} parent=0 // pred_check_branch
    %19 = sbr.rel (0) target = $region13
  $region12: #{forward.1} parent=0 // pred_region
    _
  $region13: #{forward.1} parent=0 // pred_fallthru
    _
  // Predicated region
  $region14: #{forward.1} parent=0 // pred_check
    _
  $region15: #{forward.1} parent=0 // pred_check_branch
    %21 = sbr.rel (0) target = $region17
  $region16: #{forward.1} parent=0 // pred_region
    _
  $region17: #{forward.1} parent=0 // pred_fallthru
    _
  // Predicated region
  $region18: #{forward.1} parent=0 // pred_check
    _
  $region19: #{forward.1} parent=0 // pred_check_branch
    %23 = sbr.rel (0) target = $region21
  $region20: #{forward.1} parent=0 // pred_region
    _
  $region21: #{forward.1} parent=0 // pred_fallthru
    _
  // Predicated region
  $region22: #{forward.1} parent=0 // pred_check
    _
  $region23: #{forward.1} parent=0 // pred_check_branch
    %25 = sbr.rel (0) target = $region25
  $region24: #{forward.1} parent=0 // pred_region
    _
  $region25: #{forward.1} parent=0 // pred_fallthru
    _
  // Predicated region
  $region26: #{forward.1} parent=0 // pred_check
    _
  $region27: #{forward.1} parent=0 // pred_check_branch
    %27 = sbr.rel (0) target = $region29
  $region28: #{forward.1} parent=0 // pred_region
    _
  $region29: #{forward.1} parent=0 // pred_fallthru
    _
  // Predicated region
  $region30: #{forward.1} parent=0 // pred_check
    _
  $region31: #{forward.1} parent=0 // pred_check_branch
    %29 = sbr.rel (0) target = $region33
  $region32: #{forward.1} parent=0 // pred_region
    _
  $region33: #{forward.1} parent=0 // pred_fallthru
    _
  // Predicated region
  $region34: #{forward.1} parent=0 // pred_check
    _
  $region35: #{forward.1} parent=0 // pred_check_branch
    %31 = sbr.rel (0) target = $region37
  $region36: #{forward.1} parent=0 // pred_region
    _
  $region37: #{forward.1} parent=0 // pred_fallthru
    _
  %v33 = vld [vmem:[%s0] sm:$0xf]
  %v34 = vld [vmem:[%s0 + $0x4] sm:$0xf]
  %v35 = vld [vmem:[%s0 + $0x8] sm:$0xf]
  %v36 = vld [vmem:[%s0 + $0xc] sm:$0xf]
  %v37 = vld [vmem:[%s0 + $0x10] sm:$0xf]
  %v38 = vld [vmem:[%s0 + $0x14] sm:$0xf]
  %v39 = vld [vmem:[%s0 + $0x18] sm:$0xf]
  %v40 = vld [vmem:[%s0 + $0x1c] sm:$0xf]
  %v41 = vld [vmem:[%s0 + $0x20] sm:$0xf]
  %v42 = vld [vmem:[%s0 + $0x24] sm:$0xf]
  %v43 = vld [vmem:[%s0 + $0x28] sm:$0xf]
  %v44 = vld [vmem:[%s0 + $0x2c] sm:$0xf]
  %v45 = vld [vmem:[%s0 + $0x30] sm:$0xf]
  %v46 = vld [vmem:[%s0 + $0x34] sm:$0xf]
  %v47 = vld [vmem:[%s0 + $0x38] sm:$0xf]
  %v48 = vld [vmem:[%s0 + $0x3c] sm:$0xf]
  %v49 = vld [vmem:[%s1] sm:$0xf]
  %v50 = vld [vmem:[%s1 + $0x4] sm:$0xf]
  %v51 = vld [vmem:[%s1 + $0x8] sm:$0xf]
  %v52 = vld [vmem:[%s1 + $0xc] sm:$0xf]
  %v53 = vld [vmem:[%s1 + $0x10] sm:$0xf]
  %v54 = vld [vmem:[%s1 + $0x14] sm:$0xf]
  %v55 = vld [vmem:[%s1 + $0x18] sm:$0xf]
  %v56 = vld [vmem:[%s1 + $0x1c] sm:$0xf]
  %v57 = vld [vmem:[%s1 + $0x20] sm:$0xf]
  %v58 = vld [vmem:[%s1 + $0x24] sm:$0xf]
  %v59 = vld [vmem:[%s1 + $0x28] sm:$0xf]
  %v60 = vld [vmem:[%s1 + $0x2c] sm:$0xf]
  %v61 = vld [vmem:[%s1 + $0x30] sm:$0xf]
  %v62 = vld [vmem:[%s1 + $0x34] sm:$0xf]
  %v63 = vld [vmem:[%s1 + $0x38] sm:$0xf]
  %v64 = vld [vmem:[%s1 + $0x3c] sm:$0xf]
  %v81 = vunpack.c.l.b16 %v49
  %v82 = vunpack.c.l.b16 %v50
  %v83 = vunpack.c.l.b16 %v51
  %v84 = vunpack.c.l.b16 %v52
  %v85 = vunpack.c.l.b16 %v53
  %v86 = vunpack.c.l.b16 %v54
  %v87 = vunpack.c.l.b16 %v55
  %v88 = vunpack.c.l.b16 %v56
  %v89 = vunpack.c.l.b16 %v57
  %v90 = vunpack.c.l.b16 %v58
  %v91 = vunpack.c.l.b16 %v59
  %v92 = vunpack.c.l.b16 %v60
  %v93 = vunpack.c.l.b16 %v61
  %v94 = vunpack.c.l.b16 %v62
  %v95 = vunpack.c.l.b16 %v63
  %v96 = vunpack.c.l.b16 %v64
  %v97 = vpack.c.b16 %v82, %v81
  %v98 = vpack.c.b16 %v84, %v83
  %v99 = vpack.c.b16 %v86, %v85
  %v100 = vpack.c.b16 %v88, %v87
  %v101 = vpack.c.b16 %v90, %v89
  %v102 = vpack.c.b16 %v92, %v91
  %v103 = vpack.c.b16 %v94, %v93
  %v104 = vpack.c.b16 %v96, %v95
  %v129 = vunpack.c.l.b16 %v33
  %v130 = vunpack.c.l.b16 %v34
  %v131 = vunpack.c.l.b16 %v35
  %v132 = vunpack.c.l.b16 %v36
  %v133 = vunpack.c.l.b16 %v37
  %v134 = vunpack.c.l.b16 %v38
  %v135 = vunpack.c.l.b16 %v39
  %v136 = vunpack.c.l.b16 %v40
  %v137 = vunpack.c.l.b16 %v41
  %v138 = vunpack.c.l.b16 %v42
  %v139 = vunpack.c.l.b16 %v43
  %v140 = vunpack.c.l.b16 %v44
  %v141 = vunpack.c.l.b16 %v45
  %v142 = vunpack.c.l.b16 %v46
  %v143 = vunpack.c.l.b16 %v47
  %v144 = vunpack.c.l.b16 %v48
  %v145 = vpack.c.b16 %v130, %v129
  %v146 = vpack.c.b16 %v132, %v131
  %v147 = vpack.c.b16 %v134, %v133
  %v148 = vpack.c.b16 %v136, %v135
  %v149 = vpack.c.b16 %v138, %v137
  %v150 = vpack.c.b16 %v140, %v139
  %v151 = vpack.c.b16 %v142, %v141
  %v152 = vpack.c.b16 %v144, %v143
  %161 = vmatprep.subr.bf16.mxu0 0
  %162 = vmatpush1.bf16.msra.mxu0 %v152
  %163 = vmatprep.subr.bf16.mxu0 0
  %164 = vmatpush1.bf16.msra.mxu0 %v151
  %165 = vmatprep.subr.bf16.mxu0 0
  %166 = vmatpush1.bf16.msra.mxu0 %v150
  %167 = vmatprep.subr.bf16.mxu0 0
  %168 = vmatpush1.bf16.msra.mxu0 %v149
  %169 = vmatprep.subr.bf16.mxu0 0
  %170 = vmatpush1.bf16.msra.mxu0 %v148
  %171 = vmatprep.subr.bf16.mxu0 0
  %172 = vmatpush1.bf16.msra.mxu0 %v147
  %173 = vmatprep.subr.bf16.mxu0 0
  %174 = vmatpush1.bf16.msra.mxu0 %v146
  %175 = vmatprep.subr.bf16.mxu0 0
  %176 = vmatpush1.bf16.msra.mxu0 %v145
  %177 = vmatprep.subr.bf16.mxu0 0
  %178 = vmatpush2.bf16.msra.mxu0 0
  %179 = vmatprep.subr.bf16.mxu0 0
  %180 = vmatpush2.bf16.msra.mxu0 0
  %181 = vmatprep.subr.bf16.mxu0 0
  %182 = vmatpush2.bf16.msra.mxu0 0
  %183 = vmatprep.subr.bf16.mxu0 0
  %184 = vmatpush2.bf16.msra.mxu0 0
  %185 = vmatprep.subr.bf16.mxu0 0
  %186 = vmatpush2.bf16.msra.mxu0 0
  %187 = vmatprep.subr.bf16.mxu0 0
  %188 = vmatpush2.bf16.msra.mxu0 0
  %189 = vmatprep.subr.bf16.mxu0 0
  %190 = vmatpush2.bf16.msra.mxu0 0
  %191 = vmatprep.subr.bf16.mxu0 0
  %192 = vmatpush2.bf16.msra.mxu0 0
  %193 = vmatprep.mubr.bf16.mxu0 0
  %194 = vmatmul.mubr.bf16.gmra.mxu0 %v97
  %v195 = vpop.f32.mrf.mxu0
  %v196 = vadd.f32 0.0, %v195
  %v197 = vpop.f32.mrf.mxu0
  %v198 = vpop.f32.mrf.mxu0
  %v199 = vadd.f32 0.0, %v198
  %v200 = vpop.f32.mrf.mxu0
  %201 = vmatprep.mubr.bf16.mxu0 0
  %202 = vmatmul.mubr.bf16.gmra.mxu0 %v98
  %v203 = vpop.f32.mrf.mxu0
  %v204 = vadd.f32 0.0, %v203
  %v205 = vpop.f32.mrf.mxu0
  %v206 = vpop.f32.mrf.mxu0
  %v207 = vadd.f32 0.0, %v206
  %v208 = vpop.f32.mrf.mxu0
  %209 = vmatprep.mubr.bf16.mxu0 0
  %210 = vmatmul.mubr.bf16.gmra.mxu0 %v99
  %v211 = vpop.f32.mrf.mxu0
  %v212 = vadd.f32 0.0, %v211
  %v213 = vpop.f32.mrf.mxu0
  %v214 = vpop.f32.mrf.mxu0
  %v215 = vadd.f32 0.0, %v214
  %v216 = vpop.f32.mrf.mxu0
  %217 = vmatprep.mubr.bf16.mxu0 0
  %218 = vmatmul.mubr.bf16.gmra.mxu0 %v100
  %v219 = vpop.f32.mrf.mxu0
  %v220 = vadd.f32 0.0, %v219
  %v221 = vpop.f32.mrf.mxu0
  %v222 = vpop.f32.mrf.mxu0
  %v223 = vadd.f32 0.0, %v222
  %v224 = vpop.f32.mrf.mxu0
  %225 = vmatprep.mubr.bf16.mxu0 0
  %226 = vmatmul.mubr.bf16.gmra.mxu0 %v101
  %v227 = vpop.f32.mrf.mxu0
  %v228 = vadd.f32 0.0, %v227
  %v229 = vpop.f32.mrf.mxu0
  %v230 = vpop.f32.mrf.mxu0
  %v231 = vadd.f32 0.0, %v230
  %v232 = vpop.f32.mrf.mxu0
  %233 = vmatprep.mubr.bf16.mxu0 0
  %234 = vmatmul.mubr.bf16.gmra.mxu0 %v102
  %v235 = vpop.f32.mrf.mxu0
  %v236 = vadd.f32 0.0, %v235
  %v237 = vpop.f32.mrf.mxu0
  %v238 = vpop.f32.mrf.mxu0
  %v239 = vadd.f32 0.0, %v238
  %v240 = vpop.f32.mrf.mxu0
  %241 = vmatprep.mubr.bf16.mxu0 0
  %242 = vmatmul.mubr.bf16.gmra.mxu0 %v103
  %v243 = vpop.f32.mrf.mxu0
  %v244 = vadd.f32 0.0, %v243
  %v245 = vpop.f32.mrf.mxu0
  %v246 = vpop.f32.mrf.mxu0
  %v247 = vadd.f32 0.0, %v246
  %v248 = vpop.f32.mrf.mxu0
  %249 = vmatprep.mubr.bf16.mxu0 0
  %250 = vmatmul.mubr.bf16.gmra.mxu0 %v104
  %v251 = vpop.f32.mrf.mxu0
  %v252 = vadd.f32 0.0, %v251
  %v253 = vpop.f32.mrf.mxu0
  %v254 = vpop.f32.mrf.mxu0
  %v255 = vadd.f32 0.0, %v254
  %v256 = vpop.f32.mrf.mxu0
  %257 = vdwg.mxu0
  %v258 = vld [vmem:[%s2] sm:$0xff]
  %v259 = vld [vmem:[%s2 + $0x8] sm:$0xff]
  %v260 = vld [vmem:[%s2 + $0x10] sm:$0xff]
  %v261 = vld [vmem:[%s2 + $0x18] sm:$0xff]
  %v262 = vld [vmem:[%s2 + $0x20] sm:$0xff]
  %v263 = vld [vmem:[%s2 + $0x28] sm:$0xff]
  %v264 = vld [vmem:[%s2 + $0x30] sm:$0xff]
  %v265 = vld [vmem:[%s2 + $0x38] sm:$0xff]
  %v266 = vld [vmem:[%s2 + $0x40] sm:$0xff]
  %v267 = vld [vmem:[%s2 + $0x48] sm:$0xff]
  %v268 = vld [vmem:[%s2 + $0x50] sm:$0xff]
  %v269 = vld [vmem:[%s2 + $0x58] sm:$0xff]
  %v270 = vld [vmem:[%s2 + $0x60] sm:$0xff]
  %v271 = vld [vmem:[%s2 + $0x68] sm:$0xff]
  %v272 = vld [vmem:[%s2 + $0x70] sm:$0xff]
  %v273 = vld [vmem:[%s2 + $0x78] sm:$0xff]
  %275 = vset.pattern.permute.xlu0 0
  %276 = vperm.xlu0 %275, %v258
  %v277 = vpop.permute.xlu0 %276
  %280 = vset.pattern.permute.xlu0 0
  %281 = vperm.xlu0 %280, %v259
  %v282 = vpop.permute.xlu0 %281
  %285 = vset.pattern.permute.xlu0 0
  %286 = vperm.xlu0 %285, %v260
  %v287 = vpop.permute.xlu0 %286
  %290 = vset.pattern.permute.xlu0 0
  %291 = vperm.xlu0 %290, %v261
  %v292 = vpop.permute.xlu0 %291
  %295 = vset.pattern.permute.xlu0 0
  %296 = vperm.xlu0 %295, %v262
  %v297 = vpop.permute.xlu0 %296
  %300 = vset.pattern.permute.xlu0 0
  %301 = vperm.xlu0 %300, %v263
  %v302 = vpop.permute.xlu0 %301
  %305 = vset.pattern.permute.xlu0 0
  %306 = vperm.xlu0 %305, %v264
  %v307 = vpop.permute.xlu0 %306
  %310 = vset.pattern.permute.xlu0 0
  %311 = vperm.xlu0 %310, %v265
  %v312 = vpop.permute.xlu0 %311
  %315 = vset.pattern.permute.xlu0 0
  %316 = vperm.xlu0 %315, %v266
  %v317 = vpop.permute.xlu0 %316
  %320 = vset.pattern.permute.xlu0 0
  %321 = vperm.xlu0 %320, %v267
  %v322 = vpop.permute.xlu0 %321
  %325 = vset.pattern.permute.xlu0 0
  %326 = vperm.xlu0 %325, %v268
  %v327 = vpop.permute.xlu0 %326
  %330 = vset.pattern.permute.xlu0 0
  %331 = vperm.xlu0 %330, %v269
  %v332 = vpop.permute.xlu0 %331
  %335 = vset.pattern.permute.xlu0 0
  %336 = vperm.xlu0 %335, %v270
  %v337 = vpop.permute.xlu0 %336
  %340 = vset.pattern.permute.xlu0 0
  %341 = vperm.xlu0 %340, %v271
  %v342 = vpop.permute.xlu0 %341
  %345 = vset.pattern.permute.xlu0 0
  %346 = vperm.xlu0 %345, %v272
  %v347 = vpop.permute.xlu0 %346
  %350 = vset.pattern.permute.xlu0 0
  %351 = vperm.xlu0 %350, %v273
  %v352 = vpop.permute.xlu0 %351
  %v354 = vmul.f32 %v196, %v277
  %v355 = vmul.f32 %v199, %v282
  %v356 = vmul.f32 %v204, %v287
  %v357 = vmul.f32 %v207, %v292
  %v358 = vmul.f32 %v212, %v297
  %v359 = vmul.f32 %v215, %v302
  %v360 = vmul.f32 %v220, %v307
  %v361 = vmul.f32 %v223, %v312
  %v362 = vmul.f32 %v228, %v317
  %v363 = vmul.f32 %v231, %v322
  %v364 = vmul.f32 %v236, %v327
  %v365 = vmul.f32 %v239, %v332
  %v366 = vmul.f32 %v244, %v337
  %v367 = vmul.f32 %v247, %v342
  %v368 = vmul.f32 %v252, %v347
  %v369 = vmul.f32 %v255, %v352
  %v370 = vpack.c.bf16 %v355, %v354
  %v371 = vpack.c.bf16 %v357, %v356
  %v372 = vpack.c.bf16 %v359, %v358
  %v373 = vpack.c.bf16 %v361, %v360
  %v374 = vpack.c.bf16 %v363, %v362
  %v375 = vpack.c.bf16 %v365, %v364
  %v376 = vpack.c.bf16 %v367, %v366
  %v377 = vpack.c.bf16 %v369, %v368
  %v378 = vld [vmem:[%s3] sm:$0xf]
  %v379 = vld [vmem:[%s3 + $0x4] sm:$0xf]
  %v380 = vld [vmem:[%s3 + $0x8] sm:$0xf]
  %v381 = vld [vmem:[%s3 + $0xc] sm:$0xf]
  %v382 = vld [vmem:[%s3 + $0x10] sm:$0xf]
  %v383 = vld [vmem:[%s3 + $0x14] sm:$0xf]
  %v384 = vld [vmem:[%s3 + $0x18] sm:$0xf]
  %v385 = vld [vmem:[%s3 + $0x1c] sm:$0xf]
  %v386 = vld [vmem:[%s3 + $0x20] sm:$0xf]
  %v387 = vld [vmem:[%s3 + $0x24] sm:$0xf]
  %v388 = vld [vmem:[%s3 + $0x28] sm:$0xf]
  %v389 = vld [vmem:[%s3 + $0x2c] sm:$0xf]
  %v390 = vld [vmem:[%s3 + $0x30] sm:$0xf]
  %v391 = vld [vmem:[%s3 + $0x34] sm:$0xf]
  %v392 = vld [vmem:[%s3 + $0x38] sm:$0xf]
  %v393 = vld [vmem:[%s3 + $0x3c] sm:$0xf]
  %v394 = vld [vmem:[%s3 + $0x40] sm:$0xf]
  %v395 = vld [vmem:[%s3 + $0x44] sm:$0xf]
  %v396 = vld [vmem:[%s3 + $0x48] sm:$0xf]
  %v397 = vld [vmem:[%s3 + $0x4c] sm:$0xf]
  %v398 = vld [vmem:[%s3 + $0x50] sm:$0xf]
  %v399 = vld [vmem:[%s3 + $0x54] sm:$0xf]
  %v400 = vld [vmem:[%s3 + $0x58] sm:$0xf]
  %v401 = vld [vmem:[%s3 + $0x5c] sm:$0xf]
  %v402 = vld [vmem:[%s3 + $0x60] sm:$0xf]
  %v403 = vld [vmem:[%s3 + $0x64] sm:$0xf]
  %v404 = vld [vmem:[%s3 + $0x68] sm:$0xf]
  %v405 = vld [vmem:[%s3 + $0x6c] sm:$0xf]
  %v406 = vld [vmem:[%s3 + $0x70] sm:$0xf]
  %v407 = vld [vmem:[%s3 + $0x74] sm:$0xf]
  %v408 = vld [vmem:[%s3 + $0x78] sm:$0xf]
  %v409 = vld [vmem:[%s3 + $0x7c] sm:$0xf]
  %v410 = vld [vmem:[%s4] sm:$0x1]
  %v412 = vlaneseq
  %v413 = vshrl.u32 %v412, 7
  %v414 = vsub.s32 0, %v413
  %v415 = vrot.slane %v410, %v414
  %v449 = vunpack.c.l.b16 %v378
  %v450 = vunpack.c.l.b16 %v379
  %v451 = vunpack.c.l.b16 %v380
  %v452 = vunpack.c.l.b16 %v381
  %v453 = vunpack.c.l.b16 %v382
  %v454 = vunpack.c.l.b16 %v383
  %v455 = vunpack.c.l.b16 %v384
  %v456 = vunpack.c.l.b16 %v385
  %v457 = vunpack.c.l.b16 %v386
  %v458 = vunpack.c.l.b16 %v387
  %v459 = vunpack.c.l.b16 %v388
  %v460 = vunpack.c.l.b16 %v389
  %v461 = vunpack.c.l.b16 %v390
  %v462 = vunpack.c.l.b16 %v391
  %v463 = vunpack.c.l.b16 %v392
  %v464 = vunpack.c.l.b16 %v393
  %v465 = vunpack.c.l.b16 %v394
  %v466 = vunpack.c.l.b16 %v395
  %v467 = vunpack.c.l.b16 %v396
  %v468 = vunpack.c.l.b16 %v397
  %v469 = vunpack.c.l.b16 %v398
  %v470 = vunpack.c.l.b16 %v399
  %v471 = vunpack.c.l.b16 %v400
  %v472 = vunpack.c.l.b16 %v401
  %v473 = vunpack.c.l.b16 %v402
  %v474 = vunpack.c.l.b16 %v403
  %v475 = vunpack.c.l.b16 %v404
  %v476 = vunpack.c.l.b16 %v405
  %v477 = vunpack.c.l.b16 %v406
  %v478 = vunpack.c.l.b16 %v407
  %v479 = vunpack.c.l.b16 %v408
  %v480 = vunpack.c.l.b16 %v409
  %v481 = vpack.c.b16 %v450, %v449
  %v482 = vpack.c.b16 %v452, %v451
  %v483 = vpack.c.b16 %v454, %v453
  %v484 = vpack.c.b16 %v456, %v455
  %v485 = vpack.c.b16 %v458, %v457
  %v486 = vpack.c.b16 %v460, %v459
  %v487 = vpack.c.b16 %v462, %v461
  %v488 = vpack.c.b16 %v464, %v463
  %v489 = vpack.c.b16 %v466, %v465
  %v490 = vpack.c.b16 %v468, %v467
  %v491 = vpack.c.b16 %v470, %v469
  %v492 = vpack.c.b16 %v472, %v471
  %v493 = vpack.c.b16 %v474, %v473
  %v494 = vpack.c.b16 %v476, %v475
  %v495 = vpack.c.b16 %v478, %v477
  %v496 = vpack.c.b16 %v480, %v479
  %513 = vmatprep.subr.bf16.mxu0 0
  %514 = vmatpush1.bf16.msra.mxu0 %v488
  %515 = vmatprep.subr.bf16.mxu0 0
  %516 = vmatpush1.bf16.msra.mxu0 %v487
  %517 = vmatprep.subr.bf16.mxu0 0
  %518 = vmatpush1.bf16.msra.mxu0 %v486
  %519 = vmatprep.subr.bf16.mxu0 0
  %520 = vmatpush1.bf16.msra.mxu0 %v485
  %521 = vmatprep.subr.bf16.mxu0 0
  %522 = vmatpush1.bf16.msra.mxu0 %v484
  %523 = vmatprep.subr.bf16.mxu0 0
  %524 = vmatpush1.bf16.msra.mxu0 %v483
  %525 = vmatprep.subr.bf16.mxu0 0
  %526 = vmatpush1.bf16.msra.mxu0 %v482
  %527 = vmatprep.subr.bf16.mxu0 0
  %528 = vmatpush1.bf16.msra.mxu0 %v481
  %529 = vmatprep.subr.bf16.mxu0 0
  %530 = vmatpush2.bf16.msra.mxu0 %v496
  %531 = vmatprep.subr.bf16.mxu0 0
  %532 = vmatpush2.bf16.msra.mxu0 %v495
  %533 = vmatprep.subr.bf16.mxu0 0
  %534 = vmatpush2.bf16.msra.mxu0 %v494
  %535 = vmatprep.subr.bf16.mxu0 0
  %536 = vmatpush2.bf16.msra.mxu0 %v493
  %537 = vmatprep.subr.bf16.mxu0 0
  %538 = vmatpush2.bf16.msra.mxu0 %v492
  %539 = vmatprep.subr.bf16.mxu0 0
  %540 = vmatpush2.bf16.msra.mxu0 %v491
  %541 = vmatprep.subr.bf16.mxu0 0
  %542 = vmatpush2.bf16.msra.mxu0 %v490
  %543 = vmatprep.subr.bf16.mxu0 0
  %544 = vmatpush2.bf16.msra.mxu0 %v489
  %545 = vmatprep.mubr.bf16.mxu0 %v370
  %546 = vmatmul.mubr.bf16.gmra.mxu0 %v145
  %v547 = vpop.f32.mrf.mxu0
  %v548 = vadd.f32 %v415, %v547
  %v549 = vpop.f32.mrf.mxu0
  %v550 = vpop.f32.mrf.mxu0
  %v551 = vadd.f32 %v415, %v550
  %v552 = vpop.f32.mrf.mxu0
  %553 = vmatprep.mubr.bf16.mxu0 %v371
  %554 = vmatmul.mubr.bf16.gmra.mxu0 %v146
  %v555 = vpop.f32.mrf.mxu0
  %v556 = vadd.f32 %v415, %v555
  %v557 = vpop.f32.mrf.mxu0
  %v558 = vpop.f32.mrf.mxu0
  %v559 = vadd.f32 %v415, %v558
  %v560 = vpop.f32.mrf.mxu0
  %561 = vmatprep.mubr.bf16.mxu0 %v372
  %562 = vmatmul.mubr.bf16.gmra.mxu0 %v147
  %v563 = vpop.f32.mrf.mxu0
  %v564 = vadd.f32 %v415, %v563
  %v565 = vpop.f32.mrf.mxu0
  %v566 = vpop.f32.mrf.mxu0
  %v567 = vadd.f32 %v415, %v566
  %v568 = vpop.f32.mrf.mxu0
  %569 = vmatprep.mubr.bf16.mxu0 %v373
  %570 = vmatmul.mubr.bf16.gmra.mxu0 %v148
  %v571 = vpop.f32.mrf.mxu0
  %v572 = vadd.f32 %v415, %v571
  %v573 = vpop.f32.mrf.mxu0
  %v574 = vpop.f32.mrf.mxu0
  %v575 = vadd.f32 %v415, %v574
  %v576 = vpop.f32.mrf.mxu0
  %577 = vmatprep.mubr.bf16.mxu0 %v374
  %578 = vmatmul.mubr.bf16.gmra.mxu0 %v149
  %v579 = vpop.f32.mrf.mxu0
  %v580 = vadd.f32 %v415, %v579
  %v581 = vpop.f32.mrf.mxu0
  %v582 = vpop.f32.mrf.mxu0
  %v583 = vadd.f32 %v415, %v582
  %v584 = vpop.f32.mrf.mxu0
  %585 = vmatprep.mubr.bf16.mxu0 %v375
  %586 = vmatmul.mubr.bf16.gmra.mxu0 %v150
  %v587 = vpop.f32.mrf.mxu0
  %v588 = vadd.f32 %v415, %v587
  %v589 = vpop.f32.mrf.mxu0
  %v590 = vpop.f32.mrf.mxu0
  %v591 = vadd.f32 %v415, %v590
  %v592 = vpop.f32.mrf.mxu0
  %593 = vmatprep.mubr.bf16.mxu0 %v376
  %594 = vmatmul.mubr.bf16.gmra.mxu0 %v151
  %v595 = vpop.f32.mrf.mxu0
  %v596 = vadd.f32 %v415, %v595
  %v597 = vpop.f32.mrf.mxu0
  %v598 = vpop.f32.mrf.mxu0
  %v599 = vadd.f32 %v415, %v598
  %v600 = vpop.f32.mrf.mxu0
  %601 = vmatprep.mubr.bf16.mxu0 %v377
  %602 = vmatmul.mubr.bf16.gmra.mxu0 %v152
  %v603 = vpop.f32.mrf.mxu0
  %v604 = vadd.f32 %v415, %v603
  %v605 = vpop.f32.mrf.mxu0
  %v606 = vpop.f32.mrf.mxu0
  %v607 = vadd.f32 %v415, %v606
  %v608 = vpop.f32.mrf.mxu0
  %609 = vdwg.mxu0
  %v610 = vmax.f32 %v548, 0.0
  %v611 = vmax.f32 %v551, 0.0
  %v612 = vmax.f32 %v556, 0.0
  %v613 = vmax.f32 %v559, 0.0
  %v614 = vmax.f32 %v564, 0.0
  %v615 = vmax.f32 %v567, 0.0
  %v616 = vmax.f32 %v572, 0.0
  %v617 = vmax.f32 %v575, 0.0
  %v618 = vmax.f32 %v580, 0.0
  %v619 = vmax.f32 %v583, 0.0
  %v620 = vmax.f32 %v588, 0.0
  %v621 = vmax.f32 %v591, 0.0
  %v622 = vmax.f32 %v596, 0.0
  %v623 = vmax.f32 %v599, 0.0
  %v624 = vmax.f32 %v604, 0.0
  %v625 = vmax.f32 %v607, 0.0
  %v626 = vpack.c.bf16 %v611, %v610
  %v627 = vpack.c.bf16 %v613, %v612
  %v628 = vpack.c.bf16 %v615, %v614
  %v629 = vpack.c.bf16 %v617, %v616
  %v630 = vpack.c.bf16 %v619, %v618
  %v631 = vpack.c.bf16 %v621, %v620
  %v632 = vpack.c.bf16 %v623, %v622
  %v633 = vpack.c.bf16 %v625, %v624
  %v634 = vld [vmem:[%s5] sm:$0xf]
  %v635 = vld [vmem:[%s5 + $0x4] sm:$0xf]
  %v638 = vunpack.c.l.b16 %v634
  %v639 = vunpack.c.l.b16 %v635
  %v640 = vpack.c.b16 %v639, %v638
  %642 = vmatprep.subr.bf16.mxu0 0
  %643 = vmatpush1.bf16.msra.mxu0 %v633
  %644 = vmatprep.subr.bf16.mxu0 0
  %645 = vmatpush1.bf16.msra.mxu0 %v632
  %646 = vmatprep.subr.bf16.mxu0 0
  %647 = vmatpush1.bf16.msra.mxu0 %v631
  %648 = vmatprep.subr.bf16.mxu0 0
  %649 = vmatpush1.bf16.msra.mxu0 %v630
  %650 = vmatprep.subr.bf16.mxu0 0
  %651 = vmatpush1.bf16.msra.mxu0 %v629
  %652 = vmatprep.subr.bf16.mxu0 0
  %653 = vmatpush1.bf16.msra.mxu0 %v628
  %654 = vmatprep.subr.bf16.mxu0 0
  %655 = vmatpush1.bf16.msra.mxu0 %v627
  %656 = vmatprep.subr.bf16.mxu0 0
  %657 = vmatpush1.bf16.msra.mxu0 %v626
  %658 = vmatprep.subr.bf16.mxu0 0
  %659 = vmatpush2.bf16.msra.mxu0 0
  %660 = vmatprep.subr.bf16.mxu0 0
  %661 = vmatpush2.bf16.msra.mxu0 0
  %662 = vmatprep.subr.bf16.mxu0 0
  %663 = vmatpush2.bf16.msra.mxu0 0
  %664 = vmatprep.subr.bf16.mxu0 0
  %665 = vmatpush2.bf16.msra.mxu0 0
  %666 = vmatprep.subr.bf16.mxu0 0
  %667 = vmatpush2.bf16.msra.mxu0 0
  %668 = vmatprep.subr.bf16.mxu0 0
  %669 = vmatpush2.bf16.msra.mxu0 0
  %670 = vmatprep.subr.bf16.mxu0 0
  %671 = vmatpush2.bf16.msra.mxu0 0
  %672 = vmatprep.subr.bf16.mxu0 0
  %673 = vmatpush2.bf16.msra.mxu0 0
  %674 = vmatprep.mubr.bf16.mxu0 0
  %675 = vmatmul.mubr.bf16.gmra.mxu0 %v640
  %v676 = vpop.f32.mrf.mxu0
  %v677 = vadd.f32 0.0, %v676
  %v678 = vpop.f32.mrf.mxu0
  %v679 = vpop.f32.mrf.mxu0
  %v680 = vadd.f32 0.0, %v679
  %v681 = vpop.f32.mrf.mxu0
  %682 = vdwg.mxu0
  %v683 = vld [vmem:[%s6] sm:$0xff]
  %v684 = vld [vmem:[%s6 + $0x8] sm:$0xff]
  %686 = vset.pattern.permute.xlu0 0
  %687 = vperm.xlu0 %686, %v683
  %v688 = vpop.permute.xlu0 %687
  %691 = vset.pattern.permute.xlu0 0
  %692 = vperm.xlu0 %691, %v684
  %v693 = vpop.permute.xlu0 %692
  %v695 = vmul.f32 %v677, %v688
  %v696 = vmul.f32 %v680, %v693
  %v697 = vpack.c.bf16 %v696, %v695
  %v698 = vld [vmem:[%s7] sm:$0xf]
  %v699 = vld [vmem:[%s7 + $0x4] sm:$0xf]
  %v700 = vld [vmem:[%s7 + $0x8] sm:$0xf]
  %v701 = vld [vmem:[%s7 + $0xc] sm:$0xf]
  %v702 = vld [vmem:[%s7 + $0x10] sm:$0xf]
  %v703 = vld [vmem:[%s7 + $0x14] sm:$0xf]
  %v704 = vld [vmem:[%s7 + $0x18] sm:$0xf]
  %v705 = vld [vmem:[%s7 + $0x1c] sm:$0xf]
  %v706 = vld [vmem:[%s7 + $0x20] sm:$0xf]
  %v707 = vld [vmem:[%s7 + $0x24] sm:$0xf]
  %v708 = vld [vmem:[%s7 + $0x28] sm:$0xf]
  %v709 = vld [vmem:[%s7 + $0x2c] sm:$0xf]
  %v710 = vld [vmem:[%s7 + $0x30] sm:$0xf]
  %v711 = vld [vmem:[%s7 + $0x34] sm:$0xf]
  %v712 = vld [vmem:[%s7 + $0x38] sm:$0xf]
  %v713 = vld [vmem:[%s7 + $0x3c] sm:$0xf]
  %v714 = vld [vmem:[%s7 + $0x40] sm:$0xf]
  %v715 = vld [vmem:[%s7 + $0x44] sm:$0xf]
  %v716 = vld [vmem:[%s7 + $0x48] sm:$0xf]
  %v717 = vld [vmem:[%s7 + $0x4c] sm:$0xf]
  %v718 = vld [vmem:[%s7 + $0x50] sm:$0xf]
  %v719 = vld [vmem:[%s7 + $0x54] sm:$0xf]
  %v720 = vld [vmem:[%s7 + $0x58] sm:$0xf]
  %v721 = vld [vmem:[%s7 + $0x5c] sm:$0xf]
  %v722 = vld [vmem:[%s7 + $0x60] sm:$0xf]
  %v723 = vld [vmem:[%s7 + $0x64] sm:$0xf]
  %v724 = vld [vmem:[%s7 + $0x68] sm:$0xf]
  %v725 = vld [vmem:[%s7 + $0x6c] sm:$0xf]
  %v726 = vld [vmem:[%s7 + $0x70] sm:$0xf]
  %v727 = vld [vmem:[%s7 + $0x74] sm:$0xf]
  %v728 = vld [vmem:[%s7 + $0x78] sm:$0xf]
  %v729 = vld [vmem:[%s7 + $0x7c] sm:$0xf]
  %v730 = vld [vmem:[%s8] sm:$0x1]
  %v732 = vlaneseq
  %v733 = vshrl.u32 %v732, 7
  %v734 = vsub.s32 0, %v733
  %v735 = vrot.slane %v730, %v734
  %v769 = vunpack.c.l.b16 %v698
  %v770 = vunpack.c.l.b16 %v699
  %v771 = vunpack.c.l.b16 %v700
  %v772 = vunpack.c.l.b16 %v701
  %v773 = vunpack.c.l.b16 %v702
  %v774 = vunpack.c.l.b16 %v703
  %v775 = vunpack.c.l.b16 %v704
  %v776 = vunpack.c.l.b16 %v705
  %v777 = vunpack.c.l.b16 %v706
  %v778 = vunpack.c.l.b16 %v707
  %v779 = vunpack.c.l.b16 %v708
  %v780 = vunpack.c.l.b16 %v709
  %v781 = vunpack.c.l.b16 %v710
  %v782 = vunpack.c.l.b16 %v711
  %v783 = vunpack.c.l.b16 %v712
  %v784 = vunpack.c.l.b16 %v713
  %v785 = vunpack.c.l.b16 %v714
  %v786 = vunpack.c.l.b16 %v715
  %v787 = vunpack.c.l.b16 %v716
  %v788 = vunpack.c.l.b16 %v717
  %v789 = vunpack.c.l.b16 %v718
  %v790 = vunpack.c.l.b16 %v719
  %v791 = vunpack.c.l.b16 %v720
  %v792 = vunpack.c.l.b16 %v721
  %v793 = vunpack.c.l.b16 %v722
  %v794 = vunpack.c.l.b16 %v723
  %v795 = vunpack.c.l.b16 %v724
  %v796 = vunpack.c.l.b16 %v725
  %v797 = vunpack.c.l.b16 %v726
  %v798 = vunpack.c.l.b16 %v727
  %v799 = vunpack.c.l.b16 %v728
  %v800 = vunpack.c.l.b16 %v729
  %v801 = vpack.c.b16 %v770, %v769
  %v802 = vpack.c.b16 %v772, %v771
  %v803 = vpack.c.b16 %v774, %v773
  %v804 = vpack.c.b16 %v776, %v775
  %v805 = vpack.c.b16 %v778, %v777
  %v806 = vpack.c.b16 %v780, %v779
  %v807 = vpack.c.b16 %v782, %v781
  %v808 = vpack.c.b16 %v784, %v783
  %v809 = vpack.c.b16 %v786, %v785
  %v810 = vpack.c.b16 %v788, %v787
  %v811 = vpack.c.b16 %v790, %v789
  %v812 = vpack.c.b16 %v792, %v791
  %v813 = vpack.c.b16 %v794, %v793
  %v814 = vpack.c.b16 %v796, %v795
  %v815 = vpack.c.b16 %v798, %v797
  %v816 = vpack.c.b16 %v800, %v799
  %833 = vmatprep.subr.bf16.mxu0 0
  %834 = vmatpush1.bf16.msra.mxu0 %v808
  %835 = vmatprep.subr.bf16.mxu0 0
  %836 = vmatpush1.bf16.msra.mxu0 %v807
  %837 = vmatprep.subr.bf16.mxu0 0
  %838 = vmatpush1.bf16.msra.mxu0 %v806
  %839 = vmatprep.subr.bf16.mxu0 0
  %840 = vmatpush1.bf16.msra.mxu0 %v805
  %841 = vmatprep.subr.bf16.mxu0 0
  %842 = vmatpush1.bf16.msra.mxu0 %v804
  %843 = vmatprep.subr.bf16.mxu0 0
  %844 = vmatpush1.bf16.msra.mxu0 %v803
  %845 = vmatprep.subr.bf16.mxu0 0
  %846 = vmatpush1.bf16.msra.mxu0 %v802
  %847 = vmatprep.subr.bf16.mxu0 0
  %848 = vmatpush1.bf16.msra.mxu0 %v801
  %849 = vmatprep.subr.bf16.mxu0 0
  %850 = vmatpush2.bf16.msra.mxu0 %v816
  %851 = vmatprep.subr.bf16.mxu0 0
  %852 = vmatpush2.bf16.msra.mxu0 %v815
  %853 = vmatprep.subr.bf16.mxu0 0
  %854 = vmatpush2.bf16.msra.mxu0 %v814
  %855 = vmatprep.subr.bf16.mxu0 0
  %856 = vmatpush2.bf16.msra.mxu0 %v813
  %857 = vmatprep.subr.bf16.mxu0 0
  %858 = vmatpush2.bf16.msra.mxu0 %v812
  %859 = vmatprep.subr.bf16.mxu0 0
  %860 = vmatpush2.bf16.msra.mxu0 %v811
  %861 = vmatprep.subr.bf16.mxu0 0
  %862 = vmatpush2.bf16.msra.mxu0 %v810
  %863 = vmatprep.subr.bf16.mxu0 0
  %864 = vmatpush2.bf16.msra.mxu0 %v809
  %865 = vmatprep.mubr.bf16.mxu0 %v697
  %866 = vmatmul.mubr.bf16.gmra.mxu0 %v626
  %v867 = vpop.f32.mrf.mxu0
  %v868 = vadd.f32 %v735, %v867
  %v869 = vpop.f32.mrf.mxu0
  %v870 = vpop.f32.mrf.mxu0
  %v871 = vadd.f32 %v735, %v870
  %v872 = vpop.f32.mrf.mxu0
  %873 = vdwg.mxu0
  %874 = vst [vmem:[%s9] sm:$0xff] %v868
  %875 = vst [vmem:[%s9 + $0x8] sm:$0xff] %v871
  // Predicated region
  $region38: #{forward.1} parent=0 // pred_check
    _
  $region39: #{forward.1} parent=0 // pred_check_branch
    %877 = sbr.rel (0) target = $region41
  $region40: #{forward.1} parent=0 // pred_region
    _
  $region41: #{forward.1} parent=0 // pred_fallthru
    _
  // Predicated region
  $region42: #{forward.1} parent=0 // pred_check
    _
  $region43: #{forward.1} parent=0 // pred_check_branch
    %879 = sbr.rel (0) target = $region45
  $region44: #{forward.1} parent=0 // pred_region
    _
  $region45: #{forward.1} parent=0 // pred_fallthru
    _

</llo_original>
